<compile_context>
chip_gen: v6e
topology: v6e:2x2x1
jax: 0.10.0
libtpu: 0.0.40
codegen_flags: <defaults>
</compile_context>

<pallas_src>
import functools

import jax
import jax.numpy as jnp
import numpy as np
from jax import lax
from jax.experimental import pallas as pl
from jax.experimental.pallas import tpu as pltpu

LRELU_SLOPE = 0.1

CFG = dict(
    generator_input_channels=8,
    resblock_kernel_sizes=[3, 7],
    resblock_dilation_sizes=[[1, 3, 5], [1, 3, 5]],
    upsample_rates=[2, 2],
    upsample_kernel_sizes=[4, 4],
    upsample_initial_channel=32,
)


# --------------------------- roll-convention probe ---------------------------

_ROLL_SIGN = None


def _roll_sign():
    """+1 if pltpu.roll follows jnp.roll's shift sign convention, else -1."""
    global _ROLL_SIGN
    if _ROLL_SIGN is None:
        def k(x_ref, o_ref):
            o_ref[...] = pltpu.roll(x_ref[...], shift=1, axis=1)
        x = jnp.tile(jnp.arange(128, dtype=jnp.float32)[None, :], (8, 1))
        y = pl.pallas_call(k, out_shape=jax.ShapeDtypeStruct((8, 128), jnp.float32))(x)
        _ROLL_SIGN = 1 if bool(jnp.allclose(y, jnp.roll(x, 1, axis=1))) else -1
    return _ROLL_SIGN


def _lane_roll(x, shift, n):
    """jnp.roll(x, shift, axis=-1) semantics via the XLU rotate."""
    s = (_roll_sign() * shift) % n
    if s == 0:
        return x
    return pltpu.roll(x, shift=s, axis=1)


# ------------------------------ in-kernel helpers -----------------------------

def _leaky(x, slope):
    return jnp.where(x >= 0, x, x * slope)


def _shifted(a, delta, lane, L):
    """piece[:, t] = a[:, t + delta] if 0 <= t + delta < L else 0 (zero pad)."""
    if delta == 0:
        return a
    if delta >= L or delta <= -L:
        return jnp.zeros_like(a)
    rolled = _lane_roll(a, -delta, L)
    mask = lane < (L - delta) if delta > 0 else lane >= (-delta)
    return jnp.where(mask, rolled, 0)


def _same_conv(a, w_ref, b, *, K, dil, lane, L):
    """Zero-padded ('same') Conv1d on the true [0, L) frame, no physical pad.

    a:     (Cin, L)  bf16, already-activated input
    w_ref: (K, Cout, Cin) bf16 ref (tap-major)
    b:     (Cout, 1) f32 bias
    Per-tap shifted copies go straight into K MXU dots accumulated in f32;
    the (K*Cin, L) im2col buffer is never materialized.
    """
    p = dil * (K - 1) // 2
    acc = None
    for j in range(K):
        piece = _shifted(a, j * dil - p, lane, L)
        y = jnp.dot(w_ref[j], piece, preferred_element_type=jnp.float32)
        acc = y if acc is None else acc + y
    return acc + b


def _convT_phases(h, w_ref, b, wide_ref, *, M, L):
    """leaky(0.1) + polyphase ConvTranspose1d -> all `stride` phases at once.

    h:        (Cin, L) f32 stage signal (pre-activation)
    w_ref:    (M, s*Cout, Cin) bf16;  w_ref[m][r*Cout+co, ci] = Wt[ci, co, m*s+r]
    b:        (s*Cout, 1) f32 (bias tiled per phase)
    wide_ref: (Cin, L+M-1) bf16 VMEM scratch (zero right-tail -> no edge masks)
    returns   (s*Cout, L+M-1) f32 phases:  [r*Cout+co, Q] = y_full[co, Q*s + r]
    """
    a = _leaky(h, LRELU_SLOPE).astype(jnp.bfloat16)
    Lq = L + M - 1
    if M > 1:
        wide_ref[:, pl.ds(L, M - 1)] = jnp.zeros((a.shape[0], M - 1), jnp.bfloat16)
    wide_ref[:, pl.ds(0, L)] = a
    wide = wide_ref[...]
    acc = None
    for m in range(M):
        piece = wide if m == 0 else _lane_roll(wide, m, Lq)
        y = jnp.dot(w_ref[m], piece, preferred_element_type=jnp.float32)
        acc = y if acc is None else acc + y
    return acc + b


# ------------------------------ fused stage kernel ----------------------------

def _stage_kernel(*refs, front, back, L):
    """One fused Generator stage.

    refs = (x_ref, *param_refs, o_ref[, wide_scratch_ref])
    front: ("pre", K)        conv_pre (no input activation)
           ("res", res_cfg)  averaged resblock group (leaky fused, shared)
    back:  ("convT", s, M)   leaky(0.1) + polyphase ConvTranspose phases
           ("post", K)       leaky(0.01) + conv_post + tanh
    """
    if back[0] == "convT":
        x_ref, o_ref, wide_ref = refs[0], refs[-2], refs[-1]
        prm = refs[1:-2]
    else:
        x_ref, o_ref, wide_ref = refs[0], refs[-1], None
        prm = refs[1:-1]

    lane = lax.broadcasted_iota(jnp.int32, (1, L), 1)   # hoisted, reused everywhere
    x = x_ref[0]
    pi = 0

    if front[0] == "pre":
        h = _same_conv(x.astype(jnp.bfloat16), prm[pi], prm[pi + 1][...],
                       K=front[1], dil=1, lane=lane, L=L)
        pi += 2
    else:
        res_cfg = front[1]
        x_act = _leaky(x, LRELU_SLOPE).astype(jnp.bfloat16)   # shared by both branches
        acc = None
        for (k, dils) in res_cfg:
            h = x
            for ti, d in enumerate(dils):
                a = x_act if ti == 0 else _leaky(h, LRELU_SLOPE).astype(jnp.bfloat16)
                t = _same_conv(a, prm[pi], prm[pi + 1][...], K=k, dil=d,
                               lane=lane, L=L)
                t = _leaky(t, LRELU_SLOPE).astype(jnp.bfloat16)
                t = _same_conv(t, prm[pi + 2], prm[pi + 3][...], K=k, dil=1,
                               lane=lane, L=L)
                pi += 4
                h = t + h
            acc = h if acc is None else acc + h
        h = acc * (1.0 / len(res_cfg))

    if back[0] == "convT":
        y = _convT_phases(h, prm[pi], prm[pi + 1][...], wide_ref, M=back[2], L=L)
    else:
        a = _leaky(h, 0.01).astype(jnp.bfloat16)
        y = _same_conv(a, prm[pi], prm[pi + 1][...], K=back[1], dil=1,
                       lane=lane, L=L)
        y = jnp.tanh(y)
    o_ref[0] = y.astype(o_ref.dtype)


def run_stage(x, front, back, params_flat):
    """One fused Generator stage as a single pallas_call (grid over batch)."""
    B, Cin, L = x.shape
    c_mid = params_flat[0].shape[1] if front[0] == "pre" else Cin
    if back[0] == "convT":
        M = back[2]
        rows, out_len = params_flat[-2].shape[1], L + M - 1
        scratch_shapes = [pltpu.VMEM((c_mid, out_len), jnp.bfloat16)]
    else:
        rows, out_len = 1, L
        scratch_shapes = []

    in_specs = [pl.BlockSpec((1, Cin, L), lambda i: (i, 0, 0))]
    for arr in params_flat:
        in_specs.append(pl.BlockSpec(arr.shape, lambda i, n=arr.ndim: (0,) * n))

    kern = functools.partial(_stage_kernel, front=front, back=back, L=L)
    return pl.pallas_call(
        kern,
        out_shape=jax.ShapeDtypeStruct((B, rows, out_len), jnp.float32),
        grid=(B,),
        in_specs=in_specs,
        out_specs=pl.BlockSpec((1, rows, out_len), lambda i: (i, 0, 0)),
        scratch_shapes=scratch_shapes,
        compiler_params=pltpu.CompilerParams(dimension_semantics=("parallel",)),
    )(x, *params_flat)


def _interleave_phases(ph, s, cout, p_up, t_out):
    """(B, s*Cout, Lq) phases -> (B, Cout, t_out) time signal (XLA glue)."""
    B, _, lq = ph.shape
    y = ph.reshape(B, s, cout, lq)
    y = jnp.transpose(y, (0, 2, 3, 1)).reshape(B, cout, lq * s)
    return y[:, :, p_up: p_up + t_out]


# ----------------------------- weight preparation -----------------------------

def _wn(v, g):
    """weight_norm (torch default dim=0): w = g * v / ||v|| over all dims != 0."""
    axes = tuple(range(1, v.ndim))
    return g * v * lax.rsqrt(jnp.sum(v * v, axis=axes, keepdims=True))


def _conv_w3(w):      # torch Conv1d (Cout, Cin, K) -> (K, Cout, Cin) bf16
    return jnp.transpose(w, (2, 0, 1)).astype(jnp.bfloat16)


def _bias2(b):
    return b.reshape(-1, 1).astype(jnp.float32)


def _poly_w3(wt, s, K):   # torch ConvT (Cin, Cout, K) -> (M, s*Cout, Cin) bf16
    Cin, Cout, _ = wt.shape
    M = -(-K // s)
    wp = jnp.pad(wt, ((0, 0), (0, 0), (0, M * s - K)))
    wp = wp.reshape(Cin, Cout, M, s)            # [ci, co, m, r]
    wp = jnp.transpose(wp, (2, 3, 1, 0))        # [m, r, co, ci]
    return wp.reshape(M, s * Cout, Cin).astype(jnp.bfloat16)


def prepare_params(params, cfg):
    """Fold weight_norm + reshape/cast every weight once (inference-time prep)."""
    nk = len(cfg['resblock_kernel_sizes'])
    prep = {}
    cp = params['conv_pre']
    prep['pre'] = (_conv_w3(_wn(cp['v'], cp['g'])), _bias2(cp['b']))
    prep['ups'] = []
    for i, (u, k) in enumerate(zip(cfg['upsample_rates'], cfg['upsample_kernel_sizes'])):
        up = params['ups'][i]
        prep['ups'].append((_poly_w3(_wn(up['v'], up['g']), u, k),
                            _bias2(jnp.tile(up['b'], u))))
    prep['res'] = []
    for i in range(len(cfg['upsample_rates'])):
        flat = []
        for j in range(nk):
            rb = params['resblocks'][i * nk + j]
            for t in range(len(cfg['resblock_dilation_sizes'][j])):
                c1, c2 = rb['convs1'][t], rb['convs2'][t]
                flat += [_conv_w3(_wn(c1['v'], c1['g'])), _bias2(c1['b']),
                         _conv_w3(_wn(c2['v'], c2['g'])), _bias2(c2['b'])]
        prep['res'].append(flat)
    po = params['conv_post']
    prep['post'] = (_conv_w3(_wn(po['v'], po['g'])), _bias2(po['b']))
    return prep


# --------------------------------- forward ------------------------------------

def generator_forward(prep, cfg, x):
    """x: (B, C, T) NCL float32 -> (B, 1, T * prod(upsample_rates))."""
    rates, ksz = cfg['upsample_rates'], cfg['upsample_kernel_sizes']
    res_cfg = tuple((k, tuple(ds)) for k, ds in
                    zip(cfg['resblock_kernel_sizes'], cfg['resblock_dilation_sizes']))
    n_up = len(rates)

    def up_meta(i):
        s, k = rates[i], ksz[i]
        return s, -(-k // s), (k - s) // 2          # stride, taps/phase, p_up

    s0, M0, _ = up_meta(0)
    ph = run_stage(x, ("pre", prep['pre'][0].shape[0]), ("convT", s0, M0),
                   list(prep['pre']) + list(prep['ups'][0]))
    t_len = x.shape[-1]
    out = None
    for i in range(n_up):
        s, M, p_up = up_meta(i)
        cout = prep['ups'][i][0].shape[1] // s
        t_len *= s
        y = _interleave_phases(ph, s, cout, p_up, t_len)
        if i + 1 < n_up:
            sn, Mn, _ = up_meta(i + 1)
            ph = run_stage(y, ("res", res_cfg), ("convT", sn, Mn),
                           prep['res'][i] + list(prep['ups'][i + 1]))
        else:
            out = run_stage(y, ("res", res_cfg), ("post", prep['post'][0].shape[0]),
                            prep['res'][i] + list(prep['post']))
    return out


# ----------------------------- parameters (demo) ------------------------------

def init_params(key, cfg):
    keys = iter(jax.random.split(key, 128))

    def conv(cout, cin, k):
        return dict(v=jax.random.normal(next(keys), (cout, cin, k), jnp.float32),
                    g=0.5 + jax.random.uniform(next(keys), (cout, 1, 1), jnp.float32),
                    b=0.1 * jax.random.normal(next(keys), (cout,), jnp.float32))

    def convT(cin, cout, k):
        return dict(v=jax.random.normal(next(keys), (cin, cout, k), jnp.float32),
                    g=0.5 + jax.random.uniform(next(keys), (cin, 1, 1), jnp.float32),
                    b=0.1 * jax.random.normal(next(keys), (cout,), jnp.float32))

    p = {}
    C0 = cfg['upsample_initial_channel']
    p['conv_pre'] = conv(C0, cfg['generator_input_channels'], 7)
    p['ups'] = []
    ch = C0
    for u, k in zip(cfg['upsample_rates'], cfg['upsample_kernel_sizes']):
        p['ups'].append(convT(ch, ch // 2, k))
        ch //= 2
    p['resblocks'] = []
    for i in range(len(cfg['upsample_rates'])):
        C = C0 // (2 ** (i + 1))
        for k, ds in zip(cfg['resblock_kernel_sizes'], cfg['resblock_dilation_sizes']):
            p['resblocks'].append(dict(convs1=[conv(C, C, k) for _ in ds],
                                       convs2=[conv(C, C, k) for _ in ds]))
    p['conv_post'] = conv(1, ch, 7)
    return p


# ------------------------------ lax reference ---------------------------------

def _ref_conv(x, w, b, d, p):
    y = lax.conv_general_dilated(x, w, (1,), [(p, p)], rhs_dilation=(d,),
                                 dimension_numbers=('NCH', 'OIH', 'NCH'),
                                 precision=lax.Precision.HIGHEST)
    return y + b[None, :, None]


def _ref_convT(x, w, b, s, p):
    K = w.shape[2]
    w_oih = jnp.transpose(w, (1, 0, 2))[:, :, ::-1]
    y = lax.conv_general_dilated(x, w_oih, (1,), [(K - 1 - p, K - 1 - p)],
                                 lhs_dilation=(s,),
                                 dimension_numbers=('NCH', 'OIH', 'NCH'),
                                 precision=lax.Precision.HIGHEST)
    return y + b[None, :, None]


def reference_forward(params, cfg, x):
    cp = params['conv_pre']
    x = _ref_conv(x, _wn(cp['v'], cp['g']), cp['b'], 1, 3)
    nk = len(cfg['resblock_kernel_sizes'])
    for i, (u, k_up) in enumerate(zip(cfg['upsample_rates'],
                                      cfg['upsample_kernel_sizes'])):
        x = _leaky(x, LRELU_SLOPE)
        up = params['ups'][i]
        x = _ref_convT(x, _wn(up['v'], up['g']), up['b'], u, (k_up - u) // 2)
        xs = None
        for j in range(nk):
            rb = params['resblocks'][i * nk + j]
            k = cfg['resblock_kernel_sizes'][j]
            ds = cfg['resblock_dilation_sizes'][j]
            h = x
            for t, d in enumerate(ds):
                c1, c2 = rb['convs1'][t], rb['convs2'][t]
                xt = _leaky(h, LRELU_SLOPE)
                xt = _ref_conv(xt, _wn(c1['v'], c1['g']), c1['b'], d, d * (k - 1) // 2)
                xt = _leaky(xt, LRELU_SLOPE)
                xt = _ref_conv(xt, _wn(c2['v'], c2['g']), c2['b'], 1, (k - 1) // 2)
                h = xt + h
            xs = h if xs is None else xs + h
        x = xs / nk
    x = _leaky(x, 0.01)
    po = params['conv_post']
    x = _ref_conv(x, _wn(po['v'], po['g']), po['b'], 1, 3)
    return jnp.tanh(x)


# ----------------------------------- main --------------------------------------

if __name__ == "__main__":
    key = jax.random.PRNGKey(0)
    kp, kx = jax.random.split(key)
    params = init_params(kp, CFG)

    B, Cin, T = 2, CFG['generator_input_channels'], 16
    x = jax.random.normal(kx, (B, Cin, T), jnp.float32)

    _roll_sign()                       # resolve HW roll convention once
    prep = prepare_params(params, CFG)  # weight_norm folded once, outside the jit

    fwd = jax.jit(lambda pr, xx: generator_forward(pr, CFG, xx))
    out = jax.block_until_ready(fwd(prep, x))
    T_out = T * int(np.prod(CFG['upsample_rates']))
    assert out.shape == (B, 1, T_out), out.shape

    ref = jax.block_until_ready(reference_forward(params, CFG, x))
    # kernel matmuls run bf16 operands with f32 accumulation; reference is full f32
    np.testing.assert_allclose(np.asarray(out), np.asarray(ref),
                               rtol=5e-2, atol=3e-2)
    print("KERNEL_OK")
</pallas_src>

<mosaic_0001>
module attributes {stable_mosaic.version = 11 : i64} {
  func.func @k(%arg0: memref<8x128xf32, #tpu.memory_space<vmem>>, %arg1: memref<8x128xf32, #tpu.memory_space<vmem>>) attributes {dimension_semantics = [], scalar_prefetch = 0 : i64, scratch_operands = 0 : i64, tpu.core_type = #tpu.core_type<tc>} {
    %c0 = arith.constant 0 : index
    %c0_0 = arith.constant 0 : index
    %0 = vector.load %arg0[%c0, %c0_0] : memref<8x128xf32, #tpu.memory_space<vmem>>, vector<8x128xf32>
    %c1_i32 = arith.constant 1 : i32
    %1 = tpu.dynamic_rotate %0 by %c1_i32 dim 1 : vector<8x128xf32>, i32 -> vector<8x128xf32>
    %c0_1 = arith.constant 0 : index
    %c0_2 = arith.constant 0 : index
    %2 = vector.load %arg1[%c0_1, %c0_2] : memref<8x128xf32, #tpu.memory_space<vmem>>, vector<8x128xf32>
    tpu.vector_store %arg1[%c0_1, %c0_2], %1 {strides = array<i32>} : memref<8x128xf32, #tpu.memory_space<vmem>>, vector<8x128xf32>,
    return
  }
}

</mosaic_0001>

<llo_original>
// kernel: tpu_custom_call.1
$region0: #{tpu_custom_call.1}
  #allocation0 [shape = 'u32[]', space=smem, size = 0x4, offset = 0x4, fixed_abs, tag = 'smem constant byte address 0x4 - core index']
  #allocation1 [shape = 'u32[144,128]{1,0:T(1,128)}', space=vmem, size = 0x12000, scoped, tag = 'internal scratch']
  %s0 = inlined_call_operand.hbm [shape: f32[8,128], index: 0, kind: input, shape index: {}]
  %s1 = inlined_call_operand.hbm [shape: f32[8,128], index: 1, kind: output, shape index: {}]
  %s2 = sld [smem:[#allocation0]]
  $region18: #{tpu_custom_call.1} parent=0
    _
  %s4 = ssub.s32 1, %s2
  %s5 = scalar_select 0, %s4, %s2
  $region1: #{tpu_custom_call.1} parent=0
    #allocation2 [shape = 'u8[4096]{0}', space=vmem, size = 0x1000, scoped, tag = 'input window, operand 0, single buffered']
    #allocation3 [shape = 's32[1]{0}', space=sflag, size = 0x4, scoped, tag = 'scoped memory for tpu_custom_call.1']
    #allocation4 [shape = 's32[1]{0}', space=sflag, size = 0x4, scoped, tag = 'scoped memory for tpu_custom_call.1']
    #allocation5 [shape = 'u8[4096]{0}', space=vmem, size = 0x1000, scoped, tag = 'output window, operand 0, single buffered']
    %6 = vsyncpa [#allocation3], 0
    %7 = vsyncpa [#allocation4], 0
    // Predicated region
    $region2: #{tpu_custom_call.1} parent=1 // pred_check
      _
    $region3: #{tpu_custom_call.1} parent=1 // pred_check_branch
      %9 = sbr.rel (0) target = $region5
    $region4: #{tpu_custom_call.1} parent=1 // pred_region
      %s11 = ssub.s32 128, 128
      %12 = vsyncadd [#allocation3], %s11
      %s14 = sshll.u32 [#allocation2], 4
      %s15 = int_to_ptr.vmem [resolvable:$true] %s14
      %17 = dma.hbm_to_vmem [thread:$0]  %s0, 128, %s15, [#allocation3]
    $region5: #{tpu_custom_call.1} parent=1 // pred_fallthru
      _
    // Predicated region
    $region6: #{tpu_custom_call.1} parent=1 // pred_check
      _
    $region7: #{tpu_custom_call.1} parent=1 // pred_check_branch
      %19 = sbr.rel (0) target = $region9
    $region8: #{tpu_custom_call.1} parent=1 // pred_region
      %20 = dma.done [#allocation3], 128
    $region9: #{tpu_custom_call.1} parent=1 // pred_fallthru
      _
    %v21 = vld [vmem:[#allocation2] sm:$0xff]
    %22 = vrot.lane.b32.xlu0 %v21, 1
    %v23 = vpop.permute.xlu0 %22
    %24 = vst [vmem:[#allocation5] sm:$0xff] %v23
    // Predicated region
    $region10: #{tpu_custom_call.1} parent=1 // pred_check
      _
    $region11: #{tpu_custom_call.1} parent=1 // pred_check_branch
      %26 = sbr.rel (0) target = $region13
    $region12: #{tpu_custom_call.1} parent=1 // pred_region
      %s28 = ssub.s32 128, 128
      %29 = vsyncadd [#allocation4], %s28
      %s31 = sshll.u32 [#allocation5], 4
      %s32 = int_to_ptr.vmem [resolvable:$true] %s31
      %34 = dma.vmem_to_hbm [thread:$0]  %s32, 128, %s1, [#allocation4]
    $region13: #{tpu_custom_call.1} parent=1 // pred_fallthru
      _
    // Predicated region
    $region14: #{tpu_custom_call.1} parent=1 // pred_check
      _
    $region15: #{tpu_custom_call.1} parent=1 // pred_check_branch
      %36 = sbr.rel (0) target = $region17
    $region16: #{tpu_custom_call.1} parent=1 // pred_region
      %37 = dma.done [#allocation4], 128
    $region17: #{tpu_custom_call.1} parent=1 // pred_fallthru
      _
    %38 = vsyncpa [#allocation3], 1
    %39 = vsyncpa [#allocation4], 1

</llo_original>
